<compile_context>
chip_gen: v7x
topology: tpu7x:2x2x1
jax: 0.10.0
libtpu: 0.0.40
codegen_flags: <defaults>
</compile_context>

<pallas_src>
import math
import jax
import jax.numpy as jnp
from jax.experimental import pallas as pl
from jax.experimental.pallas import tpu as pltpu


# ------------------------------------------------------------------ config ---
HIDDEN_SIZE = 32        # args.hidden_size
N_TOKENS = 16           # number of rows fed through self_out (e.g. atoms)
NUM_ATTENTION = 2       # args.num_attention (params only; unused in forward)


# ------------------------------------------------------- parameter creation ---
def _linear_init(key, out_features, in_features):
    """PyTorch nn.Linear default init: U(-1/sqrt(fan_in), 1/sqrt(fan_in))."""
    kw, kb = jax.random.split(key)
    bound = 1.0 / math.sqrt(in_features)
    w = jax.random.uniform(kw, (out_features, in_features), jnp.float32, -bound, bound)
    b = jax.random.uniform(kb, (out_features,), jnp.float32, -bound, bound)
    return {"weight": w, "bias": b}


def init_params(key, hidden_size=HIDDEN_SIZE, num_attention=NUM_ATTENTION):
    keys = jax.random.split(key, 8 + 5 * num_attention)
    params = {}

    # self_out: the wrapped output module (nn.Linear(hidden, hidden)) — used in forward.
    params["self_out"] = _linear_init(keys[0], hidden_size, hidden_size)

    # Prompt_generator parameters — allocated to mirror __init__, never used in forward.
    pg = {
        "fg": jax.random.normal(keys[1], (1, hidden_size * 3), jnp.float32),
        "alpha": jnp.full((1,), 0.1, jnp.float32),
        "linear": _linear_init(keys[2], hidden_size, hidden_size),
        "lr": _linear_init(keys[3], hidden_size, hidden_size * 3),
        "norm": {"gamma": jnp.ones((hidden_size,), jnp.float32),
                 "beta": jnp.zeros((hidden_size,), jnp.float32)},
        "atten_layers": [],
    }
    for a in range(num_attention):
        base = 4 + 5 * a
        pg["atten_layers"].append({
            "w_q": _linear_init(keys[base + 0], 32, hidden_size),
            "w_k": _linear_init(keys[base + 1], 32, hidden_size),
            "w_v": _linear_init(keys[base + 2], 32, hidden_size),
            "dense": _linear_init(keys[base + 3], hidden_size, 32),
            "LayerNorm": {"gamma": jnp.ones((hidden_size,), jnp.float32),
                          "beta": jnp.zeros((hidden_size,), jnp.float32)},
        })
    params["prompt_generator"] = pg
    return params


def make_self_out_kernel_params(params):
    """One-time conversion from PyTorch layout to kernel layout.

    Hoisted out of the forward path so the per-call work is ONLY the pallas_call:
      wt : (K, N) = weight.T   -> MXU consumes it directly, no in-kernel transpose
      b  : (1, N)              -> broadcast bias row for the epilogue add
    """
    w = params["self_out"]["weight"]            # (H_out, H_in) — PyTorch layout
    b = params["self_out"]["bias"]              # (H_out,)
    wt = jnp.asarray(w.T, jnp.float32)          # (H_in, H_out)
    bp = jnp.asarray(b, jnp.float32)[None, :]   # (1, H_out)
    return {"wt": wt, "b": bp}


# ------------------------------------------------------------ Pallas kernel ---
def self_out_kernel(x_ref, wt_ref, b_ref, o_ref):
    """Single-invocation Linear: y = x @ W^T + b.

    x_ref : (M, K)   activations, whole problem resident in VMEM
    wt_ref: (K, N)   weight already transposed (no in-kernel relayout)
    b_ref : (1, N)   bias row
    o_ref : (M, N)   output (whole-array block; already f32, no astype needed)
    """
    o_ref[...] = (
        jnp.dot(x_ref[...], wt_ref[...], preferred_element_type=jnp.float32)
        + b_ref[...]
    )


def prompt_generator_output_forward(kernel_params, hidden_states):
    """PromptGeneratorOutput.forward: hidden_states -> self_out(hidden_states)."""
    x = hidden_states.astype(jnp.float32)
    wt = kernel_params["wt"]                    # (K, N), prepared once
    bp = kernel_params["b"]                     # (1, N), prepared once
    m, k = x.shape
    n = wt.shape[1]

    cost = pl.CostEstimate(
        flops=2 * m * k * n,
        transcendentals=0,
        bytes_accessed=(m * k + k * n + n + m * n) * 4,
    )

    vmem = pl.BlockSpec(memory_space=pltpu.MemorySpace.VMEM)

    # Grid-free pallas_call: every operand is a single whole-array VMEM block, one
    # kernel invocation, no pipeline prologue/epilogue, nothing for megacore to shard.
    out = pl.pallas_call(
        self_out_kernel,
        out_shape=jax.ShapeDtypeStruct((m, n), jnp.float32),
        in_specs=[vmem, vmem, vmem],
        out_specs=vmem,
        cost_estimate=cost,
        compiler_params=pltpu.CompilerParams(vmem_limit_bytes=1 << 20),
    )(x, wt, bp)
    return out

    # NOTE: params["prompt_generator"] is intentionally untouched — the PyTorch forward
    # never calls self.prompt_generator; it only allocates its parameters in __init__.


# -------------------------------------------------------------------- main ---
if __name__ == "__main__":
    key = jax.random.PRNGKey(0)
    k_params, k_x = jax.random.split(key)

    params = init_params(k_params)
    kernel_params = make_self_out_kernel_params(params)   # hoisted, built once
    hidden_states = jax.random.normal(k_x, (N_TOKENS, HIDDEN_SIZE), jnp.float32)

    out = prompt_generator_output_forward(kernel_params, hidden_states)
    out = jax.block_until_ready(out)

    # Pure-JAX reference of nn.Linear for a correctness check.
    ref = hidden_states @ params["self_out"]["weight"].T + params["self_out"]["bias"]
    assert out.shape == (N_TOKENS, HIDDEN_SIZE)
    assert jnp.allclose(out, ref, atol=1e-5, rtol=1e-5), "mismatch vs reference"

    print("KERNEL_OK")
</pallas_src>

<mosaic_0001>
module attributes {stable_mosaic.version = 11 : i64} {
  func.func @self_out_kernel(%arg0: memref<16x32xf32, #tpu.memory_space<vmem>>, %arg1: memref<32x32xf32, #tpu.memory_space<vmem>>, %arg2: memref<1x32xf32, #tpu.memory_space<vmem>>, %arg3: memref<16x32xf32, #tpu.memory_space<vmem>>) attributes {dimension_semantics = [], scalar_prefetch = 0 : i64, scratch_operands = 0 : i64, tpu.core_type = #tpu.core_type<tc>} {
    %c0 = arith.constant 0 : index
    %c0_0 = arith.constant 0 : index
    %0 = vector.load %arg0[%c0, %c0_0] : memref<16x32xf32, #tpu.memory_space<vmem>>, vector<16x32xf32>
    %c0_1 = arith.constant 0 : index
    %c0_2 = arith.constant 0 : index
    %1 = vector.load %arg1[%c0_1, %c0_2] : memref<32x32xf32, #tpu.memory_space<vmem>>, vector<32x32xf32>
    %cst = arith.constant dense<0.000000e+00> : vector<16x32xf32>
    %2 = tpu.matmul %0, %1, %cst {dimension_numbers = #tpu.dot_dimension_numbers<[1], [0], [0], [1], [0, 0, 1, 1], [], []>} : vector<16x32xf32>, vector<32x32xf32>, vector<16x32xf32> -> vector<16x32xf32>
    %c0_3 = arith.constant 0 : index
    %c0_4 = arith.constant 0 : index
    %3 = vector.load %arg2[%c0_3, %c0_4] : memref<1x32xf32, #tpu.memory_space<vmem>>, vector<1x32xf32>
    %4 = vector.broadcast %3 : vector<1x32xf32> to vector<16x32xf32>
    %5 = arith.addf %2, %4 : vector<16x32xf32>
    %c0_5 = arith.constant 0 : index
    %c0_6 = arith.constant 0 : index
    %6 = vector.load %arg3[%c0_5, %c0_6] : memref<16x32xf32, #tpu.memory_space<vmem>>, vector<16x32xf32>
    tpu.vector_store %arg3[%c0_5, %c0_6], %5 {strides = array<i32>} : memref<16x32xf32, #tpu.memory_space<vmem>>, vector<16x32xf32>,
    return
  }
}

</mosaic_0001>

<llo_original>
// kernel: tpu_custom_call.1
$region0: #{tpu_custom_call.1}
  #allocation0 [shape = 'u32[]', space=smem, size = 0x4, offset = 0x4, fixed_abs, tag = 'smem constant byte address 0x4 - core index']
  #allocation1 [shape = 'u32[144,128]{1,0:T(1,128)}', space=vmem, size = 0x12000, scoped, tag = 'internal scratch']
  %s0 = inlined_call_operand.hbm [shape: f32[16,32], index: 0, kind: input, shape index: {}]
  %s1 = inlined_call_operand.hbm [shape: f32[32,32], index: 1, kind: input, shape index: {}]
  %s2 = inlined_call_operand.vmem [shape: f32[1,32], index: 2, kind: input, shape index: {}]
  %s3 = inlined_call_operand.hbm [shape: f32[16,32], index: 3, kind: output, shape index: {}]
  %s4 = sld [smem:[#allocation0]]
  $region30: #{tpu_custom_call.1} parent=0
    _
  %s6 = ssub.s32 1, %s4
  %s7 = scalar_select 0, %s6, %s4
  $region1: #{tpu_custom_call.1} parent=0
    #allocation2 [shape = 'u8[8192]{0}', space=vmem, size = 0x2000, scoped, tag = 'input window, operand 0, single buffered']
    #allocation3 [shape = 's32[1]{0}', space=sflag, size = 0x4, scoped, tag = 'scoped memory for tpu_custom_call.1']
    #allocation4 [shape = 's32[1]{0}', space=sflag, size = 0x4, scoped, tag = 'scoped memory for tpu_custom_call.1']
    #allocation5 [shape = 'u8[16384]{0}', space=vmem, size = 0x4000, scoped, tag = 'input window, operand 1, single buffered']
    #allocation6 [shape = 's32[1]{0}', space=sflag, size = 0x4, scoped, tag = 'scoped memory for tpu_custom_call.1']
    #allocation7 [shape = 'u8[8192]{0}', space=vmem, size = 0x2000, scoped, tag = 'output window, operand 0, single buffered']
    %8 = vsyncpa [#allocation3], 0
    %9 = vsyncpa [#allocation6], 0
    %10 = vsyncpa [#allocation4], 0
    // Predicated region
    $region2: #{tpu_custom_call.1} parent=1 // pred_check
      _
    $region3: #{tpu_custom_call.1} parent=1 // pred_check_branch
      %12 = sbr.rel (0) target = $region5
    $region4: #{tpu_custom_call.1} parent=1 // pred_region
      %s14 = ssub.s32 256, 256
      %15 = vsyncadd [#allocation3], %s14
      %s16 = sshll.u32 [#allocation2], 4
      %s17 = int_to_ptr.vmem [resolvable:$true] %s16
      %22 = dma.hbm_to_vmem [thread:$0]  %s0, 256, %s17, [#allocation3], 128, 128, 8
    $region5: #{tpu_custom_call.1} parent=1 // pred_fallthru
      _
    // Predicated region
    $region6: #{tpu_custom_call.1} parent=1 // pred_check
      _
    $region7: #{tpu_custom_call.1} parent=1 // pred_check_branch
      %24 = sbr.rel (0) target = $region9
    $region8: #{tpu_custom_call.1} parent=1 // pred_region
      %s26 = ssub.s32 512, 512
      %27 = vsyncadd [#allocation6], %s26
      %s28 = sshll.u32 [#allocation5], 4
      %s29 = int_to_ptr.vmem [resolvable:$true] %s28
      %34 = dma.hbm_to_vmem [thread:$0]  %s1, 512, %s29, [#allocation6], 128, 128, 8
    $region9: #{tpu_custom_call.1} parent=1 // pred_fallthru
      _
    // Predicated region
    $region10: #{tpu_custom_call.1} parent=1 // pred_check
      _
    $region11: #{tpu_custom_call.1} parent=1 // pred_check_branch
      %36 = sbr.rel (0) target = $region13
    $region12: #{tpu_custom_call.1} parent=1 // pred_region
      _
    $region13: #{tpu_custom_call.1} parent=1 // pred_fallthru
      _
    // Predicated region
    $region14: #{tpu_custom_call.1} parent=1 // pred_check
      _
    $region15: #{tpu_custom_call.1} parent=1 // pred_check_branch
      %38 = sbr.rel (0) target = $region17
    $region16: #{tpu_custom_call.1} parent=1 // pred_region
      %39 = dma.done [#allocation3], 256
    $region17: #{tpu_custom_call.1} parent=1 // pred_fallthru
      _
    // Predicated region
    $region18: #{tpu_custom_call.1} parent=1 // pred_check
      _
    $region19: #{tpu_custom_call.1} parent=1 // pred_check_branch
      %41 = sbr.rel (0) target = $region21
    $region20: #{tpu_custom_call.1} parent=1 // pred_region
      %42 = dma.done [#allocation6], 512
    $region21: #{tpu_custom_call.1} parent=1 // pred_fallthru
      _
    %v43 = vld [vmem:[#allocation2] sm:$0xff]
    %v44 = vld [vmem:[#allocation2 + $0x8] sm:$0xff]
    %v45 = vld [vmem:[#allocation5] sm:$0xff]
    %v46 = vld [vmem:[#allocation5 + $0x8] sm:$0xff]
    %v47 = vld [vmem:[#allocation5 + $0x10] sm:$0xff]
    %v48 = vld [vmem:[#allocation5 + $0x18] sm:$0xff]
    %v49 = vld [vmem:[%s2] sm:$0x1]
    %v51 = vlaneseq
    %v52 = vshrl.u32 %v51, 7
    %v53 = vsub.s32 0, %v52
    %v54 = vrot.slane %v49, %v53
    %vm56 = vcmask 261120
    %v58 = vsel %vm56, %v43, 0
    %v61 = vsel %vm56, %v44, 0
    %63 = vmatprep.subr.mxu0 0.0
    %64 = vmatpush1.msra.mxu0 %v45
    %65 = vmatprep.subr.mxu0 0.0
    %66 = vmatpush1.msra.mxu0 %v46
    %67 = vmatprep.subr.mxu0 0.0
    %68 = vmatpush1.msra.mxu0 %v47
    %69 = vmatprep.subr.mxu0 0.0
    %70 = vmatpush1.msra.mxu0 %v48
    %71 = vmatprep.subr.mxu0 0.0
    %72 = vmatpush1.msra.mxu0 0.0
    %73 = vmatprep.subr.mxu0 0.0
    %74 = vmatpush1.msra.mxu0 0.0
    %75 = vmatprep.subr.mxu0 0.0
    %76 = vmatpush1.msra.mxu0 0.0
    %77 = vmatprep.subr.mxu0 0.0
    %78 = vmatpush1.msra.mxu0 0.0
    %79 = vmatprep.subr.mxu0 0.0
    %80 = vmatpush1.msra.mxu0 0.0
    %81 = vmatprep.subr.mxu0 0.0
    %82 = vmatpush1.msra.mxu0 0.0
    %83 = vmatprep.subr.mxu0 0.0
    %84 = vmatpush1.msra.mxu0 0.0
    %85 = vmatprep.subr.mxu0 0.0
    %86 = vmatpush1.msra.mxu0 0.0
    %87 = vmatprep.subr.mxu0 0.0
    %88 = vmatpush1.msra.mxu0 0.0
    %89 = vmatprep.subr.mxu0 0.0
    %90 = vmatpush1.msra.mxu0 0.0
    %91 = vmatprep.subr.mxu0 0.0
    %92 = vmatpush1.msra.mxu0 0.0
    %93 = vmatprep.subr.mxu0 0.0
    %94 = vmatpush1.msra.mxu0 0.0
    %95 = vmatprep.subr.mxu0 0.0
    %96 = vmatpush1.msra.mxu0 0.0
    %97 = vmatprep.subr.mxu0 0.0
    %98 = vmatpush1.msra.mxu0 0.0
    %99 = vmatprep.subr.mxu0 0.0
    %100 = vmatpush1.msra.mxu0 0.0
    %101 = vmatprep.subr.mxu0 0.0
    %102 = vmatpush1.msra.mxu0 0.0
    %103 = vmatprep.subr.mxu0 0.0
    %104 = vmatpush1.msra.mxu0 0.0
    %105 = vmatprep.subr.mxu0 0.0
    %106 = vmatpush1.msra.mxu0 0.0
    %107 = vmatprep.subr.mxu0 0.0
    %108 = vmatpush1.msra.mxu0 0.0
    %109 = vmatprep.subr.mxu0 0.0
    %110 = vmatpush1.msra.mxu0 0.0
    %111 = vmatprep.subr.mxu0 0.0
    %112 = vmatpush1.msra.mxu0 0.0
    %113 = vmatprep.subr.mxu0 0.0
    %114 = vmatpush1.msra.mxu0 0.0
    %115 = vmatprep.subr.mxu0 0.0
    %116 = vmatpush1.msra.mxu0 0.0
    %117 = vmatprep.subr.mxu0 0.0
    %118 = vmatpush1.msra.mxu0 0.0
    %119 = vmatprep.subr.mxu0 0.0
    %120 = vmatpush1.msra.mxu0 0.0
    %121 = vmatprep.subr.mxu0 0.0
    %122 = vmatpush1.msra.mxu0 0.0
    %123 = vmatprep.subr.mxu0 0.0
    %124 = vmatpush1.msra.mxu0 0.0
    %125 = vmatprep.subr.mxu0 0.0
    %126 = vmatpush1.msra.mxu0 0.0
    %127 = vmatprep.mubr.f32.mxu0 0.0
    %128 = vmatmul.mubr.f32.gmra.mrb[0].mxu0 %v58
    %v129 = vpop.f32.mrb[0].mxu0
    %v130 = vadd.f32 %v54, %v129
    %v131 = vpop.f32.mrb[0].mxu0
    %132 = vmatprep.mubr.f32.mxu0 0.0
    %133 = vmatmul.mubr.f32.gmra.mrb[0].mxu0 %v61
    %v134 = vpop.f32.mrb[0].mxu0
    %v135 = vadd.f32 %v54, %v134
    %v136 = vpop.f32.mrb[0].mxu0
    %137 = vdwg.mxu0
    %138 = vst.msk [vmem:[#allocation7] sm:$0xff] %vm56, %v130
    %139 = vst.msk [vmem:[#allocation7 + $0x8] sm:$0xff] %vm56, %v135
    // Predicated region
    $region22: #{tpu_custom_call.1} parent=1 // pred_check
      _
    $region23: #{tpu_custom_call.1} parent=1 // pred_check_branch
      %141 = sbr.rel (0) target = $region25
    $region24: #{tpu_custom_call.1} parent=1 // pred_region
      %s143 = ssub.s32 256, 256
      %144 = vsyncadd [#allocation4], %s143
      %s145 = sshll.u32 [#allocation7], 4
      %s146 = int_to_ptr.vmem [resolvable:$true] %s145
      %151 = dma.vmem_to_hbm [thread:$0]  %s146, 256, %s3, [#allocation4], 128, 128, 8
    $region25: #{tpu_custom_call.1} parent=1 // pred_fallthru
      _
    // Predicated region
    $region26: #{tpu_custom_call.1} parent=1 // pred_check
      _
    $region27: #{tpu_custom_call.1} parent=1 // pred_check_branch
      %153 = sbr.rel (0) target = $region29
    $region28: #{tpu_custom_call.1} parent=1 // pred_region
      %154 = dma.done [#allocation4], 256
    $region29: #{tpu_custom_call.1} parent=1 // pred_fallthru
      _
    %155 = vsyncpa [#allocation3], 1
    %156 = vsyncpa [#allocation6], 1
    %157 = vsyncpa [#allocation4], 1

</llo_original>
